<compile_context>
chip_gen: v6e
topology: v6e:2x2x1
jax: 0.10.0
libtpu: 0.0.40
codegen_flags: <defaults>
</compile_context>

<pallas_src>
import functools

import jax
import jax.numpy as jnp
from jax.experimental import pallas as pl
from jax.experimental.pallas import tpu as pltpu


def mha_kernel(x_ref, wqkv_ref, bqkv_ref, wp_ref, bp_ref, o_ref,
               acc_ref, gout_ref, *, head_dim, group_size):
    hg = pl.program_id(1)                           # head-group index (reduction axis)
    d = head_dim
    g = group_size
    gd = g * d

    x = x_ref[0]                                    # (N, E)       bf16
    w_qkv = wqkv_ref[hg]                            # (E, 3*g*d)   bf16 (Q part pre-scaled)
    b_qkv = bqkv_ref[hg]                            # (1, 3*g*d)   f32  (Q part pre-scaled)

    # Fused QKV projection for the whole head group: one deep MXU matmul.
    qkv = jnp.dot(x, w_qkv, preferred_element_type=jnp.float32) + b_qkv   # (N, 3*g*d)
    q_all = qkv[:, 0 * gd:1 * gd]
    k_all = qkv[:, 1 * gd:2 * gd]
    v_all = qkv[:, 2 * gd:3 * gd]

    # Per-head attention inside the group (g is a small static count).
    for h in range(g):
        q = q_all[:, h * d:(h + 1) * d].astype(jnp.bfloat16)
        k = k_all[:, h * d:(h + 1) * d].astype(jnp.bfloat16)
        v = v_all[:, h * d:(h + 1) * d].astype(jnp.bfloat16)

        # energy = q @ k^T  (bf16 operands, f32 accumulation)
        energy = jax.lax.dot_general(
            q, k, (((1,), (1,)), ((), ())),
            preferred_element_type=jnp.float32)                           # (N, N) f32

        # TODO(synk): no attention-mask support (module is exercised with mask=None).
        m = jnp.max(energy, axis=-1, keepdims=True)
        e = jnp.exp(energy - m)
        r = pl.reciprocal(jnp.sum(e, axis=-1, keepdims=True), approx=True)  # (N, 1)

        # Deferred softmax normalization: scale the (N, d) AV product instead of
        # the (N, N) attention matrix.
        # TODO(synk): att_drop (nn.Dropout) is identity in eval mode; not applied.
        head_out = jnp.dot(e.astype(jnp.bfloat16), v,
                           preferred_element_type=jnp.float32) * r          # (N, d) f32
        gout_ref[:, h * d:(h + 1) * d] = head_out.astype(jnp.bfloat16)

    # Output projection for the whole group: one (N, g*d) @ (g*d, E) MXU matmul,
    # accumulated across head groups.  First group writes, later groups add.
    proj = jnp.dot(gout_ref[...], wp_ref[hg],
                   preferred_element_type=jnp.float32)                      # (N, E) f32

    @pl.when(hg == 0)
    def _():
        acc_ref[...] = proj

    @pl.when(hg > 0)
    def _():
        acc_ref[...] += proj

    @pl.when(hg == pl.num_programs(1) - 1)
    def _():
        # TODO(synk): emit bf16 output if the consumer tolerates it (halves HBM
        # writeback + output VMEM double-buffer; matters most on v7x).
        o_ref[0] = (acc_ref[...] + bp_ref[...]).astype(o_ref.dtype)


def _pick_group_size(num_heads, head_dim, target_cols=128):
    """Heads per grid step: aim for g*head_dim ~= MXU depth, with g | num_heads."""
    g = max(1, min(num_heads, target_cols // max(head_dim, 1)))
    while num_heads % g != 0:
        g -= 1
    return max(g, 1)


def multi_head_attention(x, wq, bq, wk, bk, wv, bv, wp, bp, *, num_heads):
    """x: (B, N, E). Weights in torch nn.Linear convention: w* (out,in)=(E,E), b* (E,)."""
    B, N, E = x.shape
    H = num_heads
    d = E // H
    g = _pick_group_size(H, d)
    G = H // g
    gd = g * d
    scale = 1.0 / (float(E) ** 0.5)      # module uses emb_size ** 0.5 (not head_dim)

    def split_heads(w_t):
        # torch (out,in) -> (in,out), split output columns by head -> (H, E, d)
        return w_t.T.reshape(E, H, d).transpose(1, 0, 2)

    def group_cols(w_h):                 # (H, E, d) -> (G, E, g*d), head-major inside
        return w_h.reshape(G, g, E, d).transpose(0, 2, 1, 3).reshape(G, E, gd)

    def group_bias(b):                   # (E,) -> (G, 1, g*d)
        return b.reshape(G, gd)[:, None, :]

    # Fuse Q|K|V per head group, fold the softmax scale into Q, store bf16 in HBM.
    w_qkv = jnp.concatenate(
        [group_cols(split_heads(wq) * scale),
         group_cols(split_heads(wk)),
         group_cols(split_heads(wv))], axis=-1).astype(jnp.bfloat16)     # (G, E, 3*g*d)
    b_qkv = jnp.concatenate(
        [group_bias(bq * scale), group_bias(bk), group_bias(bv)],
        axis=-1).astype(jnp.float32)                                     # (G, 1, 3*g*d)

    # Projection: out (N, E) @ Wp^T; split contraction rows by head group.
    wp_g = wp.T.reshape(H, d, E).reshape(G, gd, E).astype(jnp.bfloat16)  # (G, g*d, E)
    bp_r = bp.reshape(1, E).astype(jnp.float32)

    x_bf = x.astype(jnp.bfloat16)
    out_itemsize = jnp.dtype(x.dtype).itemsize

    # Explicit scoped-VMEM budget (defaults are 16/32 MiB and get exceeded long
    # before physical VMEM): double-buffered x/out + resident weights + f32 acc
    # + energy/exp temporaries.
    vmem_bytes = (
        2 * N * E * 2                     # x, double-buffered bf16
        + 2 * N * E * out_itemsize        # output, double-buffered
        + G * E * 3 * gd * 2              # resident fused QKV weights (bf16)
        + G * gd * E * 2                  # resident projection weights (bf16)
        + G * 3 * gd * 4 + E * 4          # biases
        + N * E * 4                       # f32 cross-group accumulator
        + N * gd * 2                      # group-output slab (bf16)
        + N * 3 * gd * 4                  # fused QKV activation (f32)
        + 2 * N * N * 4                   # energy + exp temporaries (f32)
        + (4 << 20)                       # compiler headroom
    )
    vmem_limit = int(min(max(vmem_bytes, 32 << 20), 128 << 20))

    kernel = functools.partial(mha_kernel, head_dim=d, group_size=g)

    return pl.pallas_call(
        kernel,
        out_shape=jax.ShapeDtypeStruct((B, N, E), x.dtype),
        grid=(B, G),
        in_specs=[
            pl.BlockSpec((1, N, E), lambda b, hg: (b, 0, 0)),          # x (per batch)
            pl.BlockSpec((G, E, 3 * gd), lambda b, hg: (0, 0, 0)),     # fused QKV weights (resident)
            pl.BlockSpec((G, 1, 3 * gd), lambda b, hg: (0, 0, 0)),     # fused QKV bias    (resident)
            pl.BlockSpec((G, gd, E), lambda b, hg: (0, 0, 0)),         # projection rows   (resident)
            pl.BlockSpec((1, E), lambda b, hg: (0, 0)),                # projection bias   (resident)
        ],
        out_specs=pl.BlockSpec((1, N, E), lambda b, hg: (b, 0, 0)),
        scratch_shapes=[
            pltpu.VMEM((N, E), jnp.float32),        # cross-group accumulator
            pltpu.VMEM((N, gd), jnp.bfloat16),      # per-group head-output slab
        ],
        compiler_params=pltpu.CompilerParams(
            dimension_semantics=("parallel", "arbitrary"),
            vmem_limit_bytes=vmem_limit),
    )(x_bf, w_qkv, b_qkv, wp_g, bp_r)


def _make_linear_params(key, emb_size):
    """Deterministic nn.Linear-style params: W (out,in), b (out,)."""
    kw, kb = jax.random.split(key)
    bound = 1.0 / (emb_size ** 0.5)
    w = jax.random.uniform(kw, (emb_size, emb_size), jnp.float32, -bound, bound)
    b = jax.random.uniform(kb, (emb_size,), jnp.float32, -bound, bound)
    return w, b


if __name__ == "__main__":
    # Small shapes consistent with the module: batch=2, seq=8, emb=32, heads=4.
    B, N, E, H = 2, 8, 32, 4
    key = jax.random.PRNGKey(0)
    kx, kq, kk, kv, kp = jax.random.split(key, 5)

    x = jax.random.normal(kx, (B, N, E), jnp.float32)

    wq_t, bq = _make_linear_params(kq, E)   # torch convention (out, in)
    wk_t, bk = _make_linear_params(kk, E)
    wv_t, bv = _make_linear_params(kv, E)
    wp_t, bp = _make_linear_params(kp, E)

    out = multi_head_attention(x, wq_t, bq, wk_t, bk, wv_t, bv, wp_t, bp,
                               num_heads=H)
    out = jax.block_until_ready(out)

    # Pure-JAX reference: same math as the PyTorch forward (mask=None, eval),
    # mirroring the kernel's bf16-operand / f32-accumulation structure so the
    # comparison tolerance stays tight.
    def ref(x):
        f32, bf16 = jnp.float32, jnp.bfloat16
        d = E // H
        scale = 1.0 / (E ** 0.5)
        xb = x.astype(bf16)

        def lin(w_t, b, s=1.0):
            return jnp.dot(xb, (w_t.T * s).astype(bf16),
                           preferred_element_type=f32) + (b * s)

        q = lin(wq_t, bq, scale)   # scale folded into q, as in the kernel
        k = lin(wk_t, bk)
        v = lin(wv_t, bv)

        def heads(t):
            return t.reshape(B, N, H, d).transpose(0, 2, 1, 3).astype(bf16)

        qh, kh, vh = heads(q), heads(k), heads(v)
        energy = jnp.einsum('bhqd,bhkd->bhqk', qh, kh,
                            preferred_element_type=f32)
        att = jax.nn.softmax(energy, axis=-1)
        o = jnp.einsum('bhql,bhld->bhqd', att.astype(bf16), vh,
                       preferred_element_type=f32)
        o = o.transpose(0, 2, 1, 3).reshape(B, N, E).astype(bf16)
        return jnp.dot(o, wp_t.T.astype(bf16), preferred_element_type=f32) + bp

    expected = ref(x)
    assert jnp.allclose(out, expected, atol=1e-2, rtol=1e-2), \
        f"mismatch vs reference (max abs err {jnp.max(jnp.abs(out - expected))})"

    print("KERNEL_OK")
</pallas_src>

<mosaic_0001>
module attributes {stable_mosaic.version = 11 : i64} {
  func.func @mha_kernel(%arg0: i32, %arg1: i32, %arg2: memref<1x8x32xbf16, #tpu.memory_space<vmem>>, %arg3: memref<1x32x96xbf16, #tpu.memory_space<vmem>>, %arg4: memref<1x1x96xf32, #tpu.memory_space<vmem>>, %arg5: memref<1x32x32xbf16, #tpu.memory_space<vmem>>, %arg6: memref<1x32xf32, #tpu.memory_space<vmem>>, %arg7: memref<1x8x32xf32, #tpu.memory_space<vmem>>, %arg8: memref<8x32xf32, #tpu.memory_space<vmem>>, %arg9: memref<8x32xbf16, #tpu.memory_space<vmem>>) attributes {dimension_semantics = [#tpu.dimension_semantics<parallel>, #tpu.dimension_semantics<arbitrary>], iteration_bounds = array<i64: 2, 1>, scalar_prefetch = 0 : i64, scratch_operands = 2 : i64, tpu.core_type = #tpu.core_type<tc>, window_params = [{transform_indices = @transform_0, window_bounds = array<i64: 1, 8, 32>}, {pipeline_mode = #tpu.pipeline_mode<synchronous>, transform_indices = @transform_1, window_bounds = array<i64: 1, 32, 96>}, {pipeline_mode = #tpu.pipeline_mode<synchronous>, transform_indices = @transform_2, window_bounds = array<i64: 1, 1, 96>}, {pipeline_mode = #tpu.pipeline_mode<synchronous>, transform_indices = @transform_3, window_bounds = array<i64: 1, 32, 32>}, {pipeline_mode = #tpu.pipeline_mode<synchronous>, transform_indices = @transform_4, window_bounds = array<i64: 1, 32>}, {transform_indices = @transform_5, window_bounds = array<i64: 1, 8, 32>}]} {
    %c0 = arith.constant 0 : index
    %c0_0 = arith.constant 0 : index
    %c0_1 = arith.constant 0 : index
    %0 = vector.load %arg2[%c0, %c0_0, %c0_1] : memref<1x8x32xbf16, #tpu.memory_space<vmem>>, vector<1x8x32xbf16>
    %1 = vector.shape_cast %0 : vector<1x8x32xbf16> to vector<8x32xbf16>
    %2 = arith.index_cast %arg1 : i32 to index
    %c0_2 = arith.constant 0 : index
    %c0_3 = arith.constant 0 : index
    %3 = vector.load %arg3[%2, %c0_2, %c0_3] : memref<1x32x96xbf16, #tpu.memory_space<vmem>>, vector<1x32x96xbf16>
    %4 = vector.shape_cast %3 : vector<1x32x96xbf16> to vector<32x96xbf16>
    %5 = arith.index_cast %arg1 : i32 to index
    %c0_4 = arith.constant 0 : index
    %c0_5 = arith.constant 0 : index
    %6 = vector.load %arg4[%5, %c0_4, %c0_5] : memref<1x1x96xf32, #tpu.memory_space<vmem>>, vector<1x1x96xf32>
    %7 = vector.shape_cast %6 : vector<1x1x96xf32> to vector<1x96xf32>
    %cst = arith.constant dense<0.000000e+00> : vector<8x96xf32>
    %8 = tpu.matmul %1, %4, %cst {dimension_numbers = #tpu.dot_dimension_numbers<[1], [0], [0], [1], [0, 0, 1, 1], [], []>} : vector<8x32xbf16>, vector<32x96xbf16>, vector<8x96xf32> -> vector<8x96xf32>
    %9 = vector.broadcast %7 : vector<1x96xf32> to vector<8x96xf32>
    %10 = arith.addf %8, %9 : vector<8x96xf32>
    %11 = vector.extract_strided_slice %10 {offsets = [0, 0], sizes = [8, 32], strides = [1, 1]} : vector<8x96xf32> to vector<8x32xf32>
    %12 = vector.extract_strided_slice %10 {offsets = [0, 32], sizes = [8, 32], strides = [1, 1]} : vector<8x96xf32> to vector<8x32xf32>
    %13 = vector.extract_strided_slice %10 {offsets = [0, 64], sizes = [8, 32], strides = [1, 1]} : vector<8x96xf32> to vector<8x32xf32>
    %14 = vector.extract_strided_slice %11 {offsets = [0, 0], sizes = [8, 8], strides = [1, 1]} : vector<8x32xf32> to vector<8x8xf32>
    %15 = arith.truncf %14 : vector<8x8xf32> to vector<8x8xbf16>
    %16 = vector.extract_strided_slice %12 {offsets = [0, 0], sizes = [8, 8], strides = [1, 1]} : vector<8x32xf32> to vector<8x8xf32>
    %17 = arith.truncf %16 : vector<8x8xf32> to vector<8x8xbf16>
    %18 = vector.extract_strided_slice %13 {offsets = [0, 0], sizes = [8, 8], strides = [1, 1]} : vector<8x32xf32> to vector<8x8xf32>
    %19 = arith.truncf %18 : vector<8x8xf32> to vector<8x8xbf16>
    %cst_6 = arith.constant dense<0.000000e+00> : vector<8x8xf32>
    %20 = tpu.matmul %15, %17, %cst_6 {dimension_numbers = #tpu.dot_dimension_numbers<[1], [1], [0], [0], [0, 0, 1, 0], [], []>} : vector<8x8xbf16>, vector<8x8xbf16>, vector<8x8xf32> -> vector<8x8xf32>
    %cst_7 = arith.constant dense<0xFF800000> : vector<8xf32>
    %21 = vector.multi_reduction <maximumf>, %20, %cst_7 [1] : vector<8x8xf32> to vector<8xf32>
    %22 = vector.shape_cast %21 : vector<8xf32> to vector<8x1xf32>
    %23 = vector.broadcast %22 : vector<8x1xf32> to vector<8x8xf32>
    %24 = arith.subf %20, %23 : vector<8x8xf32>
    %25 = math.exp %24 : vector<8x8xf32>
    %cst_8 = arith.constant dense<0.000000e+00> : vector<8xf32>
    %26 = vector.multi_reduction <add>, %25, %cst_8 [1] : vector<8x8xf32> to vector<8xf32>
    %27 = vector.shape_cast %26 : vector<8xf32> to vector<8x1xf32>
    %28 = tpu.reciprocal %27 {approx = true} : vector<8x1xf32> -> vector<8x1xf32>
    %29 = arith.truncf %25 : vector<8x8xf32> to vector<8x8xbf16>
    %cst_9 = arith.constant dense<0.000000e+00> : vector<8x8xf32>
    %30 = tpu.matmul %29, %19, %cst_9 {dimension_numbers = #tpu.dot_dimension_numbers<[1], [0], [0], [1], [0, 0, 1, 1], [], []>} : vector<8x8xbf16>, vector<8x8xbf16>, vector<8x8xf32> -> vector<8x8xf32>
    %31 = vector.broadcast %28 : vector<8x1xf32> to vector<8x8xf32>
    %32 = arith.mulf %30, %31 : vector<8x8xf32>
    %33 = arith.truncf %32 : vector<8x8xf32> to vector<8x8xbf16>
    %c0_10 = arith.constant 0 : index
    %c0_11 = arith.constant 0 : index
    %34 = vector.load %arg9[%c0_10, %c0_11] : memref<8x32xbf16, #tpu.memory_space<vmem>>, vector<8x8xbf16>
    tpu.vector_store %arg9[%c0_10, %c0_11], %33 {strides = array<i32>} : memref<8x32xbf16, #tpu.memory_space<vmem>>, vector<8x8xbf16>,
    %35 = vector.extract_strided_slice %11 {offsets = [0, 8], sizes = [8, 8], strides = [1, 1]} : vector<8x32xf32> to vector<8x8xf32>
    %36 = arith.truncf %35 : vector<8x8xf32> to vector<8x8xbf16>
    %37 = vector.extract_strided_slice %12 {offsets = [0, 8], sizes = [8, 8], strides = [1, 1]} : vector<8x32xf32> to vector<8x8xf32>
    %38 = arith.truncf %37 : vector<8x8xf32> to vector<8x8xbf16>
    %39 = vector.extract_strided_slice %13 {offsets = [0, 8], sizes = [8, 8], strides = [1, 1]} : vector<8x32xf32> to vector<8x8xf32>
    %40 = arith.truncf %39 : vector<8x8xf32> to vector<8x8xbf16>
    %cst_12 = arith.constant dense<0.000000e+00> : vector<8x8xf32>
    %41 = tpu.matmul %36, %38, %cst_12 {dimension_numbers = #tpu.dot_dimension_numbers<[1], [1], [0], [0], [0, 0, 1, 0], [], []>} : vector<8x8xbf16>, vector<8x8xbf16>, vector<8x8xf32> -> vector<8x8xf32>
    %cst_13 = arith.constant dense<0xFF800000> : vector<8xf32>
    %42 = vector.multi_reduction <maximumf>, %41, %cst_13 [1] : vector<8x8xf32> to vector<8xf32>
    %43 = vector.shape_cast %42 : vector<8xf32> to vector<8x1xf32>
    %44 = vector.broadcast %43 : vector<8x1xf32> to vector<8x8xf32>
    %45 = arith.subf %41, %44 : vector<8x8xf32>
    %46 = math.exp %45 : vector<8x8xf32>
    %cst_14 = arith.constant dense<0.000000e+00> : vector<8xf32>
    %47 = vector.multi_reduction <add>, %46, %cst_14 [1] : vector<8x8xf32> to vector<8xf32>
    %48 = vector.shape_cast %47 : vector<8xf32> to vector<8x1xf32>
    %49 = tpu.reciprocal %48 {approx = true} : vector<8x1xf32> -> vector<8x1xf32>
    %50 = arith.truncf %46 : vector<8x8xf32> to vector<8x8xbf16>
    %cst_15 = arith.constant dense<0.000000e+00> : vector<8x8xf32>
    %51 = tpu.matmul %50, %40, %cst_15 {dimension_numbers = #tpu.dot_dimension_numbers<[1], [0], [0], [1], [0, 0, 1, 1], [], []>} : vector<8x8xbf16>, vector<8x8xbf16>, vector<8x8xf32> -> vector<8x8xf32>
    %52 = vector.broadcast %49 : vector<8x1xf32> to vector<8x8xf32>
    %53 = arith.mulf %51, %52 : vector<8x8xf32>
    %54 = arith.truncf %53 : vector<8x8xf32> to vector<8x8xbf16>
    %c0_16 = arith.constant 0 : index
    %c8 = arith.constant 8 : index
    %55 = vector.load %arg9[%c0_16, %c8] : memref<8x32xbf16, #tpu.memory_space<vmem>>, vector<8x8xbf16>
    tpu.vector_store %arg9[%c0_16, %c8], %54 {strides = array<i32>} : memref<8x32xbf16, #tpu.memory_space<vmem>>, vector<8x8xbf16>,
    %56 = vector.extract_strided_slice %11 {offsets = [0, 16], sizes = [8, 8], strides = [1, 1]} : vector<8x32xf32> to vector<8x8xf32>
    %57 = arith.truncf %56 : vector<8x8xf32> to vector<8x8xbf16>
    %58 = vector.extract_strided_slice %12 {offsets = [0, 16], sizes = [8, 8], strides = [1, 1]} : vector<8x32xf32> to vector<8x8xf32>
    %59 = arith.truncf %58 : vector<8x8xf32> to vector<8x8xbf16>
    %60 = vector.extract_strided_slice %13 {offsets = [0, 16], sizes = [8, 8], strides = [1, 1]} : vector<8x32xf32> to vector<8x8xf32>
    %61 = arith.truncf %60 : vector<8x8xf32> to vector<8x8xbf16>
    %cst_17 = arith.constant dense<0.000000e+00> : vector<8x8xf32>
    %62 = tpu.matmul %57, %59, %cst_17 {dimension_numbers = #tpu.dot_dimension_numbers<[1], [1], [0], [0], [0, 0, 1, 0], [], []>} : vector<8x8xbf16>, vector<8x8xbf16>, vector<8x8xf32> -> vector<8x8xf32>
    %cst_18 = arith.constant dense<0xFF800000> : vector<8xf32>
    %63 = vector.multi_reduction <maximumf>, %62, %cst_18 [1] : vector<8x8xf32> to vector<8xf32>
    %64 = vector.shape_cast %63 : vector<8xf32> to vector<8x1xf32>
    %65 = vector.broadcast %64 : vector<8x1xf32> to vector<8x8xf32>
    %66 = arith.subf %62, %65 : vector<8x8xf32>
    %67 = math.exp %66 : vector<8x8xf32>
    %cst_19 = arith.constant dense<0.000000e+00> : vector<8xf32>
    %68 = vector.multi_reduction <add>, %67, %cst_19 [1] : vector<8x8xf32> to vector<8xf32>
    %69 = vector.shape_cast %68 : vector<8xf32> to vector<8x1xf32>
    %70 = tpu.reciprocal %69 {approx = true} : vector<8x1xf32> -> vector<8x1xf32>
    %71 = arith.truncf %67 : vector<8x8xf32> to vector<8x8xbf16>
    %cst_20 = arith.constant dense<0.000000e+00> : vector<8x8xf32>
    %72 = tpu.matmul %71, %61, %cst_20 {dimension_numbers = #tpu.dot_dimension_numbers<[1], [0], [0], [1], [0, 0, 1, 1], [], []>} : vector<8x8xbf16>, vector<8x8xbf16>, vector<8x8xf32> -> vector<8x8xf32>
    %73 = vector.broadcast %70 : vector<8x1xf32> to vector<8x8xf32>
    %74 = arith.mulf %72, %73 : vector<8x8xf32>
    %75 = arith.truncf %74 : vector<8x8xf32> to vector<8x8xbf16>
    %c0_21 = arith.constant 0 : index
    %c16 = arith.constant 16 : index
    %76 = vector.load %arg9[%c0_21, %c16] : memref<8x32xbf16, #tpu.memory_space<vmem>>, vector<8x8xbf16>
    tpu.vector_store %arg9[%c0_21, %c16], %75 {strides = array<i32>} : memref<8x32xbf16, #tpu.memory_space<vmem>>, vector<8x8xbf16>,
    %77 = vector.extract_strided_slice %11 {offsets = [0, 24], sizes = [8, 8], strides = [1, 1]} : vector<8x32xf32> to vector<8x8xf32>
    %78 = arith.truncf %77 : vector<8x8xf32> to vector<8x8xbf16>
    %79 = vector.extract_strided_slice %12 {offsets = [0, 24], sizes = [8, 8], strides = [1, 1]} : vector<8x32xf32> to vector<8x8xf32>
    %80 = arith.truncf %79 : vector<8x8xf32> to vector<8x8xbf16>
    %81 = vector.extract_strided_slice %13 {offsets = [0, 24], sizes = [8, 8], strides = [1, 1]} : vector<8x32xf32> to vector<8x8xf32>
    %82 = arith.truncf %81 : vector<8x8xf32> to vector<8x8xbf16>
    %cst_22 = arith.constant dense<0.000000e+00> : vector<8x8xf32>
    %83 = tpu.matmul %78, %80, %cst_22 {dimension_numbers = #tpu.dot_dimension_numbers<[1], [1], [0], [0], [0, 0, 1, 0], [], []>} : vector<8x8xbf16>, vector<8x8xbf16>, vector<8x8xf32> -> vector<8x8xf32>
    %cst_23 = arith.constant dense<0xFF800000> : vector<8xf32>
    %84 = vector.multi_reduction <maximumf>, %83, %cst_23 [1] : vector<8x8xf32> to vector<8xf32>
    %85 = vector.shape_cast %84 : vector<8xf32> to vector<8x1xf32>
    %86 = vector.broadcast %85 : vector<8x1xf32> to vector<8x8xf32>
    %87 = arith.subf %83, %86 : vector<8x8xf32>
    %88 = math.exp %87 : vector<8x8xf32>
    %cst_24 = arith.constant dense<0.000000e+00> : vector<8xf32>
    %89 = vector.multi_reduction <add>, %88, %cst_24 [1] : vector<8x8xf32> to vector<8xf32>
    %90 = vector.shape_cast %89 : vector<8xf32> to vector<8x1xf32>
    %91 = tpu.reciprocal %90 {approx = true} : vector<8x1xf32> -> vector<8x1xf32>
    %92 = arith.truncf %88 : vector<8x8xf32> to vector<8x8xbf16>
    %cst_25 = arith.constant dense<0.000000e+00> : vector<8x8xf32>
    %93 = tpu.matmul %92, %82, %cst_25 {dimension_numbers = #tpu.dot_dimension_numbers<[1], [0], [0], [1], [0, 0, 1, 1], [], []>} : vector<8x8xbf16>, vector<8x8xbf16>, vector<8x8xf32> -> vector<8x8xf32>
    %94 = vector.broadcast %91 : vector<8x1xf32> to vector<8x8xf32>
    %95 = arith.mulf %93, %94 : vector<8x8xf32>
    %96 = arith.truncf %95 : vector<8x8xf32> to vector<8x8xbf16>
    %c0_26 = arith.constant 0 : index
    %c24 = arith.constant 24 : index
    %97 = vector.load %arg9[%c0_26, %c24] : memref<8x32xbf16, #tpu.memory_space<vmem>>, vector<8x8xbf16>
    tpu.vector_store %arg9[%c0_26, %c24], %96 {strides = array<i32>} : memref<8x32xbf16, #tpu.memory_space<vmem>>, vector<8x8xbf16>,
    %c0_27 = arith.constant 0 : index
    %c0_28 = arith.constant 0 : index
    %98 = vector.load %arg9[%c0_27, %c0_28] : memref<8x32xbf16, #tpu.memory_space<vmem>>, vector<8x32xbf16>
    %99 = arith.index_cast %arg1 : i32 to index
    %c0_29 = arith.constant 0 : index
    %c0_30 = arith.constant 0 : index
    %100 = vector.load %arg5[%99, %c0_29, %c0_30] : memref<1x32x32xbf16, #tpu.memory_space<vmem>>, vector<1x32x32xbf16>
    %101 = vector.shape_cast %100 : vector<1x32x32xbf16> to vector<32x32xbf16>
    %cst_31 = arith.constant dense<0.000000e+00> : vector<8x32xf32>
    %102 = tpu.matmul %98, %101, %cst_31 {dimension_numbers = #tpu.dot_dimension_numbers<[1], [0], [0], [1], [0, 0, 1, 1], [], []>} : vector<8x32xbf16>, vector<32x32xbf16>, vector<8x32xf32> -> vector<8x32xf32>
    %c0_i32 = arith.constant 0 : i32
    %103 = arith.cmpi eq, %arg1, %c0_i32 : i32
    %104 = arith.extui %103 : i1 to i32
    %c0_i32_32 = arith.constant 0 : i32
    %105 = arith.cmpi ne, %104, %c0_i32_32 : i32
    scf.if %105 {
      %c0_37 = arith.constant 0 : index
      %c0_38 = arith.constant 0 : index
      %112 = vector.load %arg8[%c0_37, %c0_38] : memref<8x32xf32, #tpu.memory_space<vmem>>, vector<8x32xf32>
      tpu.vector_store %arg8[%c0_37, %c0_38], %102 {strides = array<i32>} : memref<8x32xf32, #tpu.memory_space<vmem>>, vector<8x32xf32>,
    } else {
    }
    %c0_i32_33 = arith.constant 0 : i32
    %106 = arith.cmpi sgt, %arg1, %c0_i32_33 : i32
    %107 = arith.extui %106 : i1 to i32
    %c0_i32_34 = arith.constant 0 : i32
    %108 = arith.cmpi ne, %107, %c0_i32_34 : i32
    scf.if %108 {
      %c0_37 = arith.constant 0 : index
      %c0_38 = arith.constant 0 : index
      %112 = vector.load %arg8[%c0_37, %c0_38] : memref<8x32xf32, #tpu.memory_space<vmem>>, vector<8x32xf32>
      %113 = arith.addf %112, %102 : vector<8x32xf32>
      %c0_39 = arith.constant 0 : index
      %c0_40 = arith.constant 0 : index
      %114 = vector.load %arg8[%c0_39, %c0_40] : memref<8x32xf32, #tpu.memory_space<vmem>>, vector<8x32xf32>
      tpu.vector_store %arg8[%c0_39, %c0_40], %113 {strides = array<i32>} : memref<8x32xf32, #tpu.memory_space<vmem>>, vector<8x32xf32>,
    } else {
    }
    %c0_i32_35 = arith.constant 0 : i32
    %109 = arith.cmpi eq, %arg1, %c0_i32_35 : i32
    %110 = arith.extui %109 : i1 to i32
    %c0_i32_36 = arith.constant 0 : i32
    %111 = arith.cmpi ne, %110, %c0_i32_36 : i32
    scf.if %111 {
      %c0_37 = arith.constant 0 : index
      %c0_38 = arith.constant 0 : index
      %112 = vector.load %arg8[%c0_37, %c0_38] : memref<8x32xf32, #tpu.memory_space<vmem>>, vector<8x32xf32>
      %c0_39 = arith.constant 0 : index
      %c0_40 = arith.constant 0 : index
      %113 = vector.load %arg6[%c0_39, %c0_40] : memref<1x32xf32, #tpu.memory_space<vmem>>, vector<1x32xf32>
      %114 = vector.broadcast %113 : vector<1x32xf32> to vector<8x32xf32>
      %115 = arith.addf %112, %114 : vector<8x32xf32>
      %c0_41 = arith.constant 0 : index
      %c0_42 = arith.constant 0 : index
      %c0_43 = arith.constant 0 : index
      %116 = vector.load %arg7[%c0_41, %c0_42, %c0_43] : memref<1x8x32xf32, #tpu.memory_space<vmem>>, vector<1x8x32xf32>
      %117 = vector.shape_cast %116 : vector<1x8x32xf32> to vector<8x32xf32>
      %118 = vector.shape_cast %115 : vector<8x32xf32> to vector<1x8x32xf32>
      tpu.vector_store %arg7[%c0_41, %c0_42, %c0_43], %118 {strides = array<i32>} : memref<1x8x32xf32, #tpu.memory_space<vmem>>, vector<1x8x32xf32>,
    } else {
    }
    return
  }
  func.func @transform_0(%arg0: i32, %arg1: i32) -> (i32, i32, i32) {
    %c0_i32 = arith.constant 0 : i32
    %c0_i32_0 = arith.constant 0 : i32
    %c0_i32_1 = arith.constant 0 : i32
    return %arg0, %c0_i32, %c0_i32_0 : i32, i32, i32
  }
  func.func @transform_1(%arg0: i32, %arg1: i32) -> (i32, i32, i32) {
    %c0_i32 = arith.constant 0 : i32
    %c0_i32_0 = arith.constant 0 : i32
    %c0_i32_1 = arith.constant 0 : i32
    %c0_i32_2 = arith.constant 0 : i32
    return %c0_i32, %c0_i32_0, %c0_i32_1 : i32, i32, i32
  }
  func.func @transform_2(%arg0: i32, %arg1: i32) -> (i32, i32, i32) {
    %c0_i32 = arith.constant 0 : i32
    %c0_i32_0 = arith.constant 0 : i32
    %c0_i32_1 = arith.constant 0 : i32
    %c0_i32_2 = arith.constant 0 : i32
    return %c0_i32, %c0_i32_0, %c0_i32_1 : i32, i32, i32
  }
  func.func @transform_3(%arg0: i32, %arg1: i32) -> (i32, i32, i32) {
    %c0_i32 = arith.constant 0 : i32
    %c0_i32_0 = arith.constant 0 : i32
    %c0_i32_1 = arith.constant 0 : i32
    %c0_i32_2 = arith.constant 0 : i32
    return %c0_i32, %c0_i32_0, %c0_i32_1 : i32, i32, i32
  }
  func.func @transform_4(%arg0: i32, %arg1: i32) -> (i32, i32) {
    %c0_i32 = arith.constant 0 : i32
    %c0_i32_0 = arith.constant 0 : i32
    %c0_i32_1 = arith.constant 0 : i32
    return %c0_i32, %c0_i32_0 : i32, i32
  }
  func.func @transform_5(%arg0: i32, %arg1: i32) -> (i32, i32, i32) {
    %c0_i32 = arith.constant 0 : i32
    %c0_i32_0 = arith.constant 0 : i32
    %c0_i32_1 = arith.constant 0 : i32
    return %arg0, %c0_i32, %c0_i32_0 : i32, i32, i32
  }
}

</mosaic_0001>

<llo_original>
// kernel: tpu_custom_call.1
$region0: #{tpu_custom_call.1}
  #allocation0 [shape = 'u32[]', space=smem, size = 0x4, offset = 0x4, fixed_abs, tag = 'smem constant byte address 0x4 - core index']
  #allocation1 [shape = 'u32[144,128]{1,0:T(1,128)}', space=vmem, size = 0x12000, scoped, tag = 'internal scratch']
  #allocation2 [shape = 'f32[8,32]{1,0:T(8,128)}', space=vmem, size = 0x1000, scoped, tag = 'scratch operand']
  #allocation3 [shape = 'bf16[8,32]{1,0:T(8,128)(2,1)}', space=vmem, size = 0x800, scoped, tag = 'scratch operand']
  %s0 = inlined_call_operand.hbm [shape: bf16[2,8,32], index: 0, kind: input, shape index: {}]
  %s1 = inlined_call_operand.hbm [shape: bf16[1,32,96], index: 1, kind: input, shape index: {}]
  %s2 = inlined_call_operand.vmem [shape: f32[1,1,96], index: 2, kind: input, shape index: {}]
  %s3 = inlined_call_operand.hbm [shape: bf16[1,32,32], index: 3, kind: input, shape index: {}]
  %s4 = inlined_call_operand.vmem [shape: f32[1,32], index: 4, kind: input, shape index: {}]
  %s5 = inlined_call_operand.hbm [shape: f32[2,8,32], index: 5, kind: output, shape index: {}]
  %s6 = sld [smem:[#allocation0]]
  $region77: #{tpu_custom_call.1} parent=0
    _
  %s8 = ssub.s32 1, %s6
  %s9 = scalar_select 0, %s8, %s6
  $region1: #{tpu_custom_call.1} parent=0
    #allocation4 [shape = 'u8[4096]{0}', space=vmem, size = 0x1000, scoped, tag = 'input window, operand 0']
    #allocation5 [shape = 's32[2]{0}', space=sflag, size = 0x8, scoped, tag = 'scoped memory for tpu_custom_call.1']
    #allocation6 [shape = 's32[2]{0}', space=sflag, size = 0x8, scoped, tag = 'scoped memory for tpu_custom_call.1']
    #allocation7 [shape = 'u8[8192]{0}', space=vmem, size = 0x2000, scoped, tag = 'input window, operand 1, single buffered']
    #allocation8 [shape = 's32[1]{0}', space=sflag, size = 0x4, scoped, tag = 'scoped memory for tpu_custom_call.1']
    #allocation9 [shape = 'u8[8192]{0}', space=vmem, size = 0x2000, scoped, tag = 'input window, operand 3, single buffered']
    #allocation10 [shape = 'u8[8192]{0}', space=vmem, size = 0x2000, scoped, tag = 'output window, operand 0']
    %10 = vsyncpa [#allocation5], 0
    %s11 = scalar_lea.sflag [#allocation5], 1
    %12 = vsyncpa %s11, 0
    %13 = vsyncpa [#allocation8], 0
    %14 = vsyncpa [#allocation6], 0
    %s15 = scalar_lea.sflag [#allocation6], 1
    %16 = vsyncpa %s15, 0
    loop: start=0, step=1, limit=4
    $region2: #{tpu_custom_call.1} parent=1 // loop_pre_header
      _
    $region3: #{tpu_custom_call.1} parent=1 // loop_header
      %s18 = sphi 0, %s22
      %p19 = scmp.ge.s32.totalorder %s18, 4
      %s25 = sphi 0, %s37
      %s26 = sphi 0, %s33
      %s27 = sphi 0, %s25
      %s28 = sphi 0, %s26
      %s29 = sphi 0, %s27
      %s30 = sphi 0, %s28
      %s40 = sphi 0, %s42
      %s43 = sphi 0, %s40
      %s44 = sphi 0, %s43
      %s60 = sphi 0, %s44
      %s64 = sphi 0, %s64
      %s66 = sphi 0, %s64
      %s67 = sphi 0, %s66
      %s81 = sphi 0, %s67
      %s85 = sphi 0, %s85
      %s87 = sphi 0, %s85
      %s88 = sphi 0, %s87
      %s102 = sphi 0, %s88
      %s106 = sphi 0, %s106
      %s108 = sphi 0, %s106
      %s109 = sphi 0, %s108
      %s123 = sphi 0, %s109
      %s127 = sphi 0, %s127
      %s129 = sphi 0, %s127
      %s130 = sphi 0, %s129
      %s144 = sphi 0, %s130
      %s150 = sphi 0, %s152
      %s153 = sphi 0, %s150
      %s154 = sphi 0, %s153
      %s170 = sphi 0, %s154
    $region4: #{tpu_custom_call.1} parent=1 // loop_header_branch
      %21 = sbr.rel (%p19) target = $region8
    $region5: #{tpu_custom_call.1} parent=1 // loop_body
      %s23 = ssub.s32 %s18, 1
      %s24 = ssub.s32 %s18, 2
      %s31 = sadd.s32 1, %s26
      %p32 = scmp.ge.s32.totalorder %s31, 1
      %s33 = scalar_select %p32, 0, %s31
      %s34 = sadd.s32 1, %s25
      %s35 = scalar_select %p32, %s34, %s25
      %p36 = scmp.ge.s32.totalorder %s35, 2
      %s37 = scalar_select %p36, 0, %s35
      %s38 = ssub.s32 %s25, %s37
      %p39 = scmp.eq.s32.totalorder %s38, 0
      %s41 = sadd.s32 %s40, 1
      %s42 = scalar_select %p39, %s40, %s41
      %p45 = pneg %p39
      %p46 = scmp.eq.s32.totalorder %s18, 1
      %p47 = por %p45, %p46
      %p48 = scmp.ne.s32.totalorder %s40, %s43
      %p49 = scmp.eq.s32.totalorder %s18, 0
      %p50 = por %p48, %p49
      %p51 = scmp.ne.s32.totalorder %s40, %s43
      %p52 = scmp.eq.s32.totalorder %s23, 1
      %p53 = por %p51, %p52
      %p54 = scmp.ne.s32.totalorder %s43, %s44
      %p55 = scmp.eq.s32.totalorder %s23, 0
      %p56 = por %p54, %p55
      %p57 = scmp.ne.s32.totalorder %s43, %s44
      %p58 = scmp.eq.s32.totalorder %s24, 1
      %p59 = por %p57, %p58
      %p61 = scmp.ne.s32.totalorder %s44, %s60
      %p62 = scmp.eq.s32.totalorder %s24, 0
      %p63 = por %p61, %p62
      %s65 = sadd.s32 %s64, 1
      %p68 = scmp.eq.s32.totalorder %s18, 1
      %p69 = scmp.ne.s32.totalorder %s64, %s66
      %p70 = scmp.eq.s32.totalorder %s18, 0
      %p71 = por %p69, %p70
      %p72 = scmp.ne.s32.totalorder %s64, %s66
      %p73 = scmp.eq.s32.totalorder %s23, 1
      %p74 = por %p72, %p73
      %p75 = scmp.ne.s32.totalorder %s66, %s67
      %p76 = scmp.eq.s32.totalorder %s23, 0
      %p77 = por %p75, %p76
      %p78 = scmp.ne.s32.totalorder %s66, %s67
      %p79 = scmp.eq.s32.totalorder %s24, 1
      %p80 = por %p78, %p79
      %p82 = scmp.ne.s32.totalorder %s67, %s81
      %p83 = scmp.eq.s32.totalorder %s24, 0
      %p84 = por %p82, %p83
      %s86 = sadd.s32 %s85, 1
      %p89 = scmp.eq.s32.totalorder %s18, 1
      %p90 = scmp.ne.s32.totalorder %s85, %s87
      %p91 = scmp.eq.s32.totalorder %s18, 0
      %p92 = por %p90, %p91
      %p93 = scmp.ne.s32.totalorder %s85, %s87
      %p94 = scmp.eq.s32.totalorder %s23, 1
      %p95 = por %p93, %p94
      %p96 = scmp.ne.s32.totalorder %s87, %s88
      %p97 = scmp.eq.s32.totalorder %s23, 0
      %p98 = por %p96, %p97
      %p99 = scmp.ne.s32.totalorder %s87, %s88
      %p100 = scmp.eq.s32.totalorder %s24, 1
      %p101 = por %p99, %p100
      %p103 = scmp.ne.s32.totalorder %s88, %s102
      %p104 = scmp.eq.s32.totalorder %s24, 0
      %p105 = por %p103, %p104
      %s107 = sadd.s32 %s106, 1
      %p110 = scmp.eq.s32.totalorder %s18, 1
      %p111 = scmp.ne.s32.totalorder %s106, %s108
      %p112 = scmp.eq.s32.totalorder %s18, 0
      %p113 = por %p111, %p112
      %p114 = scmp.ne.s32.totalorder %s106, %s108
      %p115 = scmp.eq.s32.totalorder %s23, 1
      %p116 = por %p114, %p115
      %p117 = scmp.ne.s32.totalorder %s108, %s109
      %p118 = scmp.eq.s32.totalorder %s23, 0
      %p119 = por %p117, %p118
      %p120 = scmp.ne.s32.totalorder %s108, %s109
      %p121 = scmp.eq.s32.totalorder %s24, 1
      %p122 = por %p120, %p121
      %p124 = scmp.ne.s32.totalorder %s109, %s123
      %p125 = scmp.eq.s32.totalorder %s24, 0
      %p126 = por %p124, %p125
      %s128 = sadd.s32 %s127, 1
      %p131 = scmp.eq.s32.totalorder %s18, 1
      %p132 = scmp.ne.s32.totalorder %s127, %s129
      %p133 = scmp.eq.s32.totalorder %s18, 0
      %p134 = por %p132, %p133
      %p135 = scmp.ne.s32.totalorder %s127, %s129
      %p136 = scmp.eq.s32.totalorder %s23, 1
      %p137 = por %p135, %p136
      %p138 = scmp.ne.s32.totalorder %s129, %s130
      %p139 = scmp.eq.s32.totalorder %s23, 0
      %p140 = por %p138, %p139
      %p141 = scmp.ne.s32.totalorder %s129, %s130
      %p142 = scmp.eq.s32.totalorder %s24, 1
      %p143 = por %p141, %p142
      %p145 = scmp.ne.s32.totalorder %s130, %s144
      %p146 = scmp.eq.s32.totalorder %s24, 0
      %p147 = por %p145, %p146
      %s148 = ssub.s32 %s25, %s37
      %p149 = scmp.eq.s32.totalorder %s148, 0
      %s151 = sadd.s32 %s150, 1
      %s152 = scalar_select %p149, %s150, %s151
      %p155 = pneg %p149
      %p156 = scmp.eq.s32.totalorder %s18, 1
      %p157 = por %p155, %p156
      %p158 = scmp.ne.s32.totalorder %s150, %s153
      %p159 = scmp.eq.s32.totalorder %s18, 0
      %p160 = por %p158, %p159
      %p161 = scmp.ne.s32.totalorder %s150, %s153
      %p162 = scmp.eq.s32.totalorder %s23, 1
      %p163 = por %p161, %p162
      %p164 = scmp.ne.s32.totalorder %s153, %s154
      %p165 = scmp.eq.s32.totalorder %s23, 0
      %p166 = por %p164, %p165
      %p167 = scmp.ne.s32.totalorder %s153, %s154
      %p168 = scmp.eq.s32.totalorder %s24, 1
      %p169 = por %p167, %p168
      %p171 = scmp.ne.s32.totalorder %s154, %s170
      %p172 = scmp.eq.s32.totalorder %s24, 0
      %p173 = por %p171, %p172
      %p174 = scmp.le.s32.totalorder 1, %s18
      %p175 = scmp.lt.s32.totalorder %s18, 3
      %p176 = pnand %p174, %p175
      %p177 = pneg %p176
      // Predicated region
      $region9: #{tpu_custom_call.1} parent=5 // pred_check
        _
      $region10: #{tpu_custom_call.1} parent=5 // pred_check_branch
        %179 = sbr.rel (%p176) target = $region12
      $region11: #{tpu_custom_call.1} parent=5 // pred_region
        %s180 = ssub.s32 %s18, 1
        // Predicated region
        $region13: #{tpu_custom_call.1} parent=11 // pred_check
          %p181 = pneg %p77
        $region14: #{tpu_custom_call.1} parent=11 // pred_check_branch
          %183 = sbr.rel (%p181) target = $region16
        $region15: #{tpu_custom_call.1} parent=11 // pred_region
          %s185 = ssub.s32 256, 256
          %186 = vsyncadd [#allocation8], %s185
          %s187 = sshll.u32 [#allocation7], 4
          %s188 = int_to_ptr.vmem [resolvable:$true] %s187
          %193 = dma.hbm_to_vmem [thread:$0]  %s1, 256, %s188, [#allocation8], 64, 64, 4
        $region16: #{tpu_custom_call.1} parent=11 // pred_fallthru
          _
        // Predicated region
        $region17: #{tpu_custom_call.1} parent=11 // pred_check
          %p194 = pneg %p98
        $region18: #{tpu_custom_call.1} parent=11 // pred_check_branch
          %196 = sbr.rel (%p194) target = $region20
        $region19: #{tpu_custom_call.1} parent=11 // pred_region
          _
        $region20: #{tpu_custom_call.1} parent=11 // pred_fallthru
          _
        // Predicated region
        $region21: #{tpu_custom_call.1} parent=11 // pred_check
          %p197 = pneg %p119
        $region22: #{tpu_custom_call.1} parent=11 // pred_check_branch
          %199 = sbr.rel (%p197) target = $region24
        $region23: #{tpu_custom_call.1} parent=11 // pred_region
          %s201 = ssub.s32 256, 256
          %202 = vsyncadd [#allocation8], %s201
          %s203 = sshll.u32 [#allocation9], 4
          %s204 = int_to_ptr.vmem [resolvable:$true] %s203
          %209 = dma.hbm_to_vmem [thread:$0]  %s3, 256, %s204, [#allocation8], 64, 64, 4
        $region24: #{tpu_custom_call.1} parent=11 // pred_fallthru
          _
        // Predicated region
        $region25: #{tpu_custom_call.1} parent=11 // pred_check
          %p210 = pneg %p140
        $region26: #{tpu_custom_call.1} parent=11 // pred_check_branch
          %212 = sbr.rel (%p210) target = $region28
        $region27: #{tpu_custom_call.1} parent=11 // pred_region
          _
        $region28: #{tpu_custom_call.1} parent=11 // pred_fallthru
          _
      $region12: #{tpu_custom_call.1} parent=5 // pred_fallthru
        _
      %p213 = scmp.lt.s32.totalorder %s18, 2
      // Predicated region
      $region29: #{tpu_custom_call.1} parent=5 // pred_check
        %p214 = pneg %p213
      $region30: #{tpu_custom_call.1} parent=5 // pred_check_branch
        %216 = sbr.rel (%p214) target = $region32
      $region31: #{tpu_custom_call.1} parent=5 // pred_region
        // Predicated region
        $region33: #{tpu_custom_call.1} parent=31 // pred_check
          %p217 = pneg %p50
        $region34: #{tpu_custom_call.1} parent=31 // pred_check_branch
          %219 = sbr.rel (%p217) target = $region36
        $region35: #{tpu_custom_call.1} parent=31 // pred_region
          %s220 = sand.u32 %s40, 1
          %s221 = scalar_lea.sflag [#allocation5], %s220
          %s222 = sand.u32 %s40, 1
          %s223 = smul.addr %s222, 4
          %s224 = scalar_lea.vmem [#allocation4], %s223
          %s226 = ssub.s32 64, 64
          %227 = vsyncadd %s221, %s226
          %s228 = smul.addr %s25, 64
          %s229 = scalar_lea.hbm %s0, %s228
          %s231 = sshll.u32 %s224, 4
          %s232 = int_to_ptr.vmem [resolvable:$true] %s231
          %234 = dma.hbm_to_vmem [thread:$0]  %s229, 64, %s232, %s221
        $region36: #{tpu_custom_call.1} parent=31 // pred_fallthru
          _
      $region32: #{tpu_custom_call.1} parent=5 // pred_fallthru
        _
      %p235 = scmp.le.s32.totalorder 1, %s18
      %p236 = scmp.lt.s32.totalorder %s18, 3
      %p237 = pnand %p235, %p236
      %p238 = pneg %p237
      // Predicated region
      $region37: #{tpu_custom_call.1} parent=5 // pred_check
        _
      $region38: #{tpu_custom_call.1} parent=5 // pred_check_branch
        %240 = sbr.rel (%p237) target = $region40
      $region39: #{tpu_custom_call.1} parent=5 // pred_region
        %s241 = ssub.s32 %s18, 1
        %s242 = sand.u32 %s43, 1
        %s243 = scalar_lea.sflag [#allocation5], %s242
        %s244 = sand.u32 %s43, 1
        %s245 = smul.addr %s244, 4
        %s246 = scalar_lea.vmem [#allocation4], %s245
        // Predicated region
        $region41: #{tpu_custom_call.1} parent=39 // pred_check
          %p247 = pneg %p56
        $region42: #{tpu_custom_call.1} parent=39 // pred_check_branch
          %249 = sbr.rel (%p247) target = $region44
        $region43: #{tpu_custom_call.1} parent=39 // pred_region
          %250 = dma.done %s243, 64
        $region44: #{tpu_custom_call.1} parent=39 // pred_fallthru
          _
        // Predicated region
        $region45: #{tpu_custom_call.1} parent=39 // pred_check
          %p251 = pneg %p77
        $region46: #{tpu_custom_call.1} parent=39 // pred_check_branch
          %253 = sbr.rel (%p251) target = $region48
        $region47: #{tpu_custom_call.1} parent=39 // pred_region
          %254 = dma.done [#allocation8], 256
        $region48: #{tpu_custom_call.1} parent=39 // pred_fallthru
          _
        // Predicated region
        $region49: #{tpu_custom_call.1} parent=39 // pred_check
          %p255 = pneg %p119
        $region50: #{tpu_custom_call.1} parent=39 // pred_check_branch
          %257 = sbr.rel (%p255) target = $region52
        $region51: #{tpu_custom_call.1} parent=39 // pred_region
          %258 = dma.done [#allocation8], 256
        $region52: #{tpu_custom_call.1} parent=39 // pred_fallthru
          _
        %s259 = sand.u32 %s43, 1
        %s260 = scalar_lea.sflag [#allocation5], %s259
        %s261 = sand.u32 %s43, 1
        %s262 = smul.addr %s261, 4
        %s263 = scalar_lea.vmem [#allocation4], %s262
        %p264 = pneg %p56
        %p265 = pneg %p53
        %p266 = pneg %p77
        %p267 = pneg %p74
        %p268 = pneg %p98
        %p269 = pneg %p95
        %p270 = pneg %p119
        %p271 = pneg %p116
        %p272 = pneg %p140
        %p273 = pneg %p137
        %p274 = pneg %p166
        %p275 = pneg %p163
        %s276 = sand.u32 %s153, 1
        %s277 = scalar_lea.sflag [#allocation6], %s276
        %s278 = sand.u32 %s153, 1
        %s279 = smul.addr %s278, 8
        %s280 = scalar_lea.vmem [#allocation10], %s279
        %v282 = vld [vmem:[%s246] sm:$0xf]
        %s283 = smul.u32 %s28, 4
        %s284 = smul.addr %s283, 4
        %s285 = scalar_lea.vmem [#allocation7], %s284
        %v286 = vld [vmem:[%s285] sm:$0xf]
        %v287 = vld [vmem:[%s285 + $0x4] sm:$0xf]
        %v288 = vld [vmem:[%s285 + $0x8] sm:$0xf]
        %v289 = vld [vmem:[%s285 + $0xc] sm:$0xf]
        %s290 = scalar_lea.vmem %s2, %s28
        %v291 = vld [vmem:[%s290] sm:$0x1]
        %v293 = vlaneseq
        %v294 = vshrl.u32 %v293, 7
        %v295 = vsub.s32 0, %v294
        %v296 = vrot.slane %v291, %v295
        %v302 = vunpack.c.l.b16 %v286
        %v303 = vunpack.c.l.b16 %v287
        %v304 = vunpack.c.l.b16 %v288
        %v305 = vunpack.c.l.b16 %v289
        %v306 = vpack.c.b16 %v303, %v302
        %v307 = vpack.c.b16 %v305, %v304
        %vm310 = vcmask 261120
        %v312 = vsel %vm310, %v282, 0
        %314 = vmatprep.subr.bf16.mxu0 0
        %315 = vmatpush1.bf16.msra.mxu0 0
        %316 = vmatprep.subr.bf16.mxu0 0
        %317 = vmatpush1.bf16.msra.mxu0 0
        %318 = vmatprep.subr.bf16.mxu0 0
        %319 = vmatpush1.bf16.msra.mxu0 0
        %320 = vmatprep.subr.bf16.mxu0 0
        %321 = vmatpush1.bf16.msra.mxu0 0
        %322 = vmatprep.subr.bf16.mxu0 0
        %323 = vmatpush1.bf16.msra.mxu0 0
        %324 = vmatprep.subr.bf16.mxu0 0
        %325 = vmatpush1.bf16.msra.mxu0 0
        %326 = vmatprep.subr.bf16.mxu0 0
        %327 = vmatpush1.bf16.msra.mxu0 %v307
        %328 = vmatprep.subr.bf16.mxu0 0
        %329 = vmatpush1.bf16.msra.mxu0 %v306
        %330 = vmatprep.subr.bf16.mxu0 0
        %331 = vmatpush2.bf16.msra.mxu0 0
        %332 = vmatprep.subr.bf16.mxu0 0
        %333 = vmatpush2.bf16.msra.mxu0 0
        %334 = vmatprep.subr.bf16.mxu0 0
        %335 = vmatpush2.bf16.msra.mxu0 0
        %336 = vmatprep.subr.bf16.mxu0 0
        %337 = vmatpush2.bf16.msra.mxu0 0
        %338 = vmatprep.subr.bf16.mxu0 0
        %339 = vmatpush2.bf16.msra.mxu0 0
        %340 = vmatprep.subr.bf16.mxu0 0
        %341 = vmatpush2.bf16.msra.mxu0 0
        %342 = vmatprep.subr.bf16.mxu0 0
        %343 = vmatpush2.bf16.msra.mxu0 0
        %344 = vmatprep.subr.bf16.mxu0 0
        %345 = vmatpush2.bf16.msra.mxu0 0
        %346 = vmatprep.mubr.bf16.mxu0 0
        %347 = vmatmul.mubr.bf16.gmra.mxu0 %v312
        %v348 = vpop.f32.mrf.mxu0
        %v349 = vadd.f32 %v296, %v348
        %v350 = vpop.f32.mrf.mxu0
        %v351 = vpop.f32.mrf.mxu0
        %v352 = vpop.f32.mrf.mxu0
        %353 = vdwg.mxu0
        %v354 = vpack.c.bf16 %v349, %v349
        %356 = vrot.lane.b32.xlu0 %v354, 96
        %v357 = vpop.permute.xlu0 %356
        %vm358 = vcmask 64512
        %v360 = vsel %vm358, %v354, 0
        %v363 = vsel %vm358, %v357, 0
        %365 = vmatprep.subr.bf16.mxu0 0
        %366 = vmatpush1.bf16.xpose.msra.mxu0 0
        %367 = vmatprep.subr.bf16.mxu0 0
        %368 = vmatpush1.bf16.xpose.msra.mxu0 0
        %369 = vmatprep.subr.bf16.mxu0 0
        %370 = vmatpush1.bf16.xpose.msra.mxu0 0
        %371 = vmatprep.subr.bf16.mxu0 0
        %372 = vmatpush1.bf16.xpose.msra.mxu0 0
        %373 = vmatprep.subr.bf16.mxu0 0
        %374 = vmatpush1.bf16.xpose.msra.mxu0 0
        %375 = vmatprep.subr.bf16.mxu0 0
        %376 = vmatpush1.bf16.xpose.msra.mxu0 0
        %377 = vmatprep.subr.bf16.mxu0 0
        %378 = vmatpush1.bf16.xpose.msra.mxu0 0
        %379 = vmatprep.subr.bf16.mxu0 0
        %380 = vmatpush1.bf16.xpose.msra.mxu0 %v363
        %381 = vmatprep.subr.bf16.mxu0 0
        %382 = vmatpush2.bf16.xpose.msra.mxu0 0
        %383 = vmatprep.subr.bf16.mxu0 0
        %384 = vmatpush2.bf16.xpose.msra.mxu0 0
        %385 = vmatprep.subr.bf16.mxu0 0
        %386 = vmatpush2.bf16.xpose.msra.mxu0 0
        %387 = vmatprep.subr.bf16.mxu0 0
        %388 = vmatpush2.bf16.xpose.msra.mxu0 0
        %389 = vmatprep.subr.bf16.mxu0 0
        %390 = vmatpush2.bf16.xpose.msra.mxu0 0
        %391 = vmatprep.subr.bf16.mxu0 0
        %392 = vmatpush2.bf16.xpose.msra.mxu0 0
        %393 = vmatprep.subr.bf16.mxu0 0
        %394 = vmatpush2.bf16.xpose.msra.mxu0 0
        %395 = vmatprep.subr.bf16.mxu0 0
        %396 = vmatpush2.bf16.xpose.msra.mxu0 0
        %397 = vmatprep.mubr.bf16.mxu0 0
        %398 = vmatmul.mubr.bf16.gmra.mxu0 %v360
        %v399 = vpop.f32.mrf.mxu0
        %v400 = vadd.f32 0.0, %v399
        %v401 = vpop.f32.mrf.mxu0
        %v402 = vpop.f32.mrf.mxu0
        %v403 = vpop.f32.mrf.mxu0
        %404 = vdwg.mxu0
        %v405 = vsel %vm358, %v400, -inf
        %406 = vmax.xlane.f32.xlu0 %v405
        %v407 = vpop.xlane.xlu0 %406
        %v408 = vsub.f32 %v400, %v407
        %v409 = vmul.f32 %v408, 1.442695
        %v410 = vpow.pop %v409
        %v411 = vsel %vm358, %v410, 0.0
        %412 = vadd.xlane.f32.xlu0 %v411
        %v413 = vpop.xlane.xlu0 %412
        %v414 = vrcp.pop %v413
        %v415 = vpack.c.bf16 %v410, %v410
        %416 = vrot.lane.b32.xlu0 %v354, 64
        %v417 = vpop.permute.xlu0 %416
        %v419 = vsel %vm358, %v415, 0
        %vm421 = vcmask 1043456
        %v423 = vsel %vm421, %v417, 0
        %425 = vmatprep.subr.bf16.mxu0 0
        %426 = vmatpush1.bf16.msra.mxu0 0
        %427 = vmatprep.subr.bf16.mxu0 0
        %428 = vmatpush1.bf16.msra.mxu0 0
        %429 = vmatprep.subr.bf16.mxu0 0
        %430 = vmatpush1.bf16.msra.mxu0 0
        %431 = vmatprep.subr.bf16.mxu0 0
        %432 = vmatpush1.bf16.msra.mxu0 0
        %433 = vmatprep.subr.bf16.mxu0 0
        %434 = vmatpush1.bf16.msra.mxu0 0
        %435 = vmatprep.subr.bf16.mxu0 0
        %436 = vmatpush1.bf16.msra.mxu0 0
        %437 = vmatprep.subr.bf16.mxu0 0
        %438 = vmatpush1.bf16.msra.mxu0 0
        %439 = vmatprep.subr.bf16.mxu0 0
        %440 = vmatpush1.bf16.msra.mxu0 %v423
        %441 = vmatprep.subr.bf16.mxu0 0
        %442 = vmatpush2.bf16.msra.mxu0 0
        %443 = vmatprep.subr.bf16.mxu0 0
        %444 = vmatpush2.bf16.msra.mxu0 0
        %445 = vmatprep.subr.bf16.mxu0 0
        %446 = vmatpush2.bf16.msra.mxu0 0
        %447 = vmatprep.subr.bf16.mxu0 0
        %448 = vmatpush2.bf16.msra.mxu0 0
        %449 = vmatprep.subr.bf16.mxu0 0
        %450 = vmatpush2.bf16.msra.mxu0 0
        %451 = vmatprep.subr.bf16.mxu0 0
        %452 = vmatpush2.bf16.msra.mxu0 0
        %453 = vmatprep.subr.bf16.mxu0 0
        %454 = vmatpush2.bf16.msra.mxu0 0
        %455 = vmatprep.subr.bf16.mxu0 0
        %456 = vmatpush2.bf16.msra.mxu0 0
        %457 = vmatprep.mubr.bf16.mxu0 0
        %458 = vmatmul.mubr.bf16.gmra.mxu0 %v419
        %v459 = vpop.f32.mrf.mxu0
        %v460 = vadd.f32 0.0, %v459
        %v461 = vpop.f32.mrf.mxu0
        %v462 = vpop.f32.mrf.mxu0
        %v463 = vpop.f32.mrf.mxu0
        %464 = vdwg.mxu0
        %v465 = vmul.f32 %v460, %v414
        %v466 = vpack.c.bf16 %v465, %v465
        %vm467 = vcmask 60416
        %468 = vst.msk [vmem:[#allocation3] sm:$0xf] %vm467, %v466
        %469 = vrot.lane.b32.xlu0 %v354, 120
        %v470 = vpop.permute.xlu0 %469
        %471 = vrot.lane.b32.xlu0 %v354, 88
        %v472 = vpop.permute.xlu0 %471
        %v474 = vsel %vm358, %v470, 0
        %v477 = vsel %vm358, %v472, 0
        %479 = vmatprep.subr.bf16.mxu0 0
        %480 = vmatpush1.bf16.xpose.msra.mxu0 0
        %481 = vmatprep.subr.bf16.mxu0 0
        %482 = vmatpush1.bf16.xpose.msra.mxu0 0
        %483 = vmatprep.subr.bf16.mxu0 0
        %484 = vmatpush1.bf16.xpose.msra.mxu0 0
        %485 = vmatprep.subr.bf16.mxu0 0
        %486 = vmatpush1.bf16.xpose.msra.mxu0 0
        %487 = vmatprep.subr.bf16.mxu0 0
        %488 = vmatpush1.bf16.xpose.msra.mxu0 0
        %489 = vmatprep.subr.bf16.mxu0 0
        %490 = vmatpush1.bf16.xpose.msra.mxu0 0
        %491 = vmatprep.subr.bf16.mxu0 0
        %492 = vmatpush1.bf16.xpose.msra.mxu0 0
        %493 = vmatprep.subr.bf16.mxu0 0
        %494 = vmatpush1.bf16.xpose.msra.mxu0 %v477
        %495 = vmatprep.subr.bf16.mxu0 0
        %496 = vmatpush2.bf16.xpose.msra.mxu0 0
        %497 = vmatprep.subr.bf16.mxu0 0
        %498 = vmatpush2.bf16.xpose.msra.mxu0 0
        %499 = vmatprep.subr.bf16.mxu0 0
        %500 = vmatpush2.bf16.xpose.msra.mxu0 0
        %501 = vmatprep.subr.bf16.mxu0 0
        %502 = vmatpush2.bf16.xpose.msra.mxu0 0
        %503 = vmatprep.subr.bf16.mxu0 0
        %504 = vmatpush2.bf16.xpose.msra.mxu0 0
        %505 = vmatprep.subr.bf16.mxu0 0
        %506 = vmatpush2.bf16.xpose.msra.mxu0 0
        %507 = vmatprep.subr.bf16.mxu0 0
        %508 = vmatpush2.bf16.xpose.msra.mxu0 0
        %509 = vmatprep.subr.bf16.mxu0 0
        %510 = vmatpush2.bf16.xpose.msra.mxu0 0
        %511 = vmatprep.mubr.bf16.mxu0 0
        %512 = vmatmul.mubr.bf16.gmra.mxu0 %v474
        %v513 = vpop.f32.mrf.mxu0
        %v514 = vadd.f32 0.0, %v513
        %v515 = vpop.f32.mrf.mxu0
        %v516 = vpop.f32.mrf.mxu0
        %v517 = vpop.f32.mrf.mxu0
        %518 = vdwg.mxu0
        %v519 = vsel %vm358, %v514, -inf
        %520 = vmax.xlane.f32.xlu0 %v519
        %v521 = vpop.xlane.xlu0 %520
        %v522 = vsub.f32 %v514, %v521
        %v523 = vmul.f32 %v522, 1.442695
        %v524 = vpow.pop %v523
        %v525 = vsel %vm358, %v524, 0.0
        %526 = vadd.xlane.f32.xlu0 %v525
        %v527 = vpop.xlane.xlu0 %526
        %v528 = vrcp.pop %v527
        %v529 = vpack.c.bf16 %v524, %v524
        %530 = vrot.lane.b32.xlu0 %v354, 56
        %v531 = vpop.permute.xlu0 %530
        %v533 = vsel %vm358, %v529, 0
        %v536 = vsel %vm421, %v531, 0
        %538 = vmatprep.subr.bf16.mxu0 0
        %539 = vmatpush1.bf16.msra.mxu0 0
        %540 = vmatprep.subr.bf16.mxu0 0
        %541 = vmatpush1.bf16.msra.mxu0 0
        %542 = vmatprep.subr.bf16.mxu0 0
        %543 = vmatpush1.bf16.msra.mxu0 0
        %544 = vmatprep.subr.bf16.mxu0 0
        %545 = vmatpush1.bf16.msra.mxu0 0
        %546 = vmatprep.subr.bf16.mxu0 0
        %547 = vmatpush1.bf16.msra.mxu0 0
        %548 = vmatprep.subr.bf16.mxu0 0
        %549 = vmatpush1.bf16.msra.mxu0 0
        %550 = vmatprep.subr.bf16.mxu0 0
        %551 = vmatpush1.bf16.msra.mxu0 0
        %552 = vmatprep.subr.bf16.mxu0 0
        %553 = vmatpush1.bf16.msra.mxu0 %v536
        %554 = vmatprep.subr.bf16.mxu0 0
        %555 = vmatpush2.bf16.msra.mxu0 0
        %556 = vmatprep.subr.bf16.mxu0 0
        %557 = vmatpush2.bf16.msra.mxu0 0
        %558 = vmatprep.subr.bf16.mxu0 0
        %559 = vmatpush2.bf16.msra.mxu0 0
        %560 = vmatprep.subr.bf16.mxu0 0
        %561 = vmatpush2.bf16.msra.mxu0 0
        %562 = vmatprep.subr.bf16.mxu0 0
        %563 = vmatpush2.bf16.msra.mxu0 0
        %564 = vmatprep.subr.bf16.mxu0 0
        %565 = vmatpush2.bf16.msra.mxu0 0
        %566 = vmatprep.subr.bf16.mxu0 0
        %567 = vmatpush2.bf16.msra.mxu0 0
        %568 = vmatprep.subr.bf16.mxu0 0
        %569 = vmatpush2.bf16.msra.mxu0 0
        %570 = vmatprep.mubr.bf16.mxu0 0
        %571 = vmatmul.mubr.bf16.gmra.mxu0 %v533
        %v572 = vpop.f32.mrf.mxu0
        %v573 = vadd.f32 0.0, %v572
        %v574 = vpop.f32.mrf.mxu0
        %v575 = vpop.f32.mrf.mxu0
        %v576 = vpop.f32.mrf.mxu0
        %577 = vdwg.mxu0
        %v578 = vmul.f32 %v573, %v528
        %v579 = vpack.c.bf16 %v578, %v578
        %v581 = vunpack.c.l.b16 %v579
        %v582 = vpack.c.b16 %v581, %v581
        %583 = vrot.lane.b32.xlu0 %v582, 8
        %v584 = vpop.permute.xlu0 %583
        %vm586 = vcmask 126016
        %587 = vst.msk [vmem:[#allocation3] sm:$0xf] %vm586, %v584
        %588 = vrot.lane.b32.xlu0 %v354, 112
        %v589 = vpop.permute.xlu0 %588
        %590 = vrot.lane.b32.xlu0 %v354, 80
        %v591 = vpop.permute.xlu0 %590
        %v593 = vsel %vm358, %v589, 0
        %v596 = vsel %vm358, %v591, 0
        %598 = vmatprep.subr.bf16.mxu0 0
        %599 = vmatpush1.bf16.xpose.msra.mxu0 0
        %600 = vmatprep.subr.bf16.mxu0 0
        %601 = vmatpush1.bf16.xpose.msra.mxu0 0
        %602 = vmatprep.subr.bf16.mxu0 0
        %603 = vmatpush1.bf16.xpose.msra.mxu0 0
        %604 = vmatprep.subr.bf16.mxu0 0
        %605 = vmatpush1.bf16.xpose.msra.mxu0 0
        %606 = vmatprep.subr.bf16.mxu0 0
        %607 = vmatpush1.bf16.xpose.msra.mxu0 0
        %608 = vmatprep.subr.bf16.mxu0 0
        %609 = vmatpush1.bf16.xpose.msra.mxu0 0
        %610 = vmatprep.subr.bf16.mxu0 0
        %611 = vmatpush1.bf16.xpose.msra.mxu0 0
        %612 = vmatprep.subr.bf16.mxu0 0
        %613 = vmatpush1.bf16.xpose.msra.mxu0 %v596
        %614 = vmatprep.subr.bf16.mxu0 0
        %615 = vmatpush2.bf16.xpose.msra.mxu0 0
        %616 = vmatprep.subr.bf16.mxu0 0
        %617 = vmatpush2.bf16.xpose.msra.mxu0 0
        %618 = vmatprep.subr.bf16.mxu0 0
        %619 = vmatpush2.bf16.xpose.msra.mxu0 0
        %620 = vmatprep.subr.bf16.mxu0 0
        %621 = vmatpush2.bf16.xpose.msra.mxu0 0
        %622 = vmatprep.subr.bf16.mxu0 0
        %623 = vmatpush2.bf16.xpose.msra.mxu0 0
        %624 = vmatprep.subr.bf16.mxu0 0
        %625 = vmatpush2.bf16.xpose.msra.mxu0 0
        %626 = vmatprep.subr.bf16.mxu0 0
        %627 = vmatpush2.bf16.xpose.msra.mxu0 0
        %628 = vmatprep.subr.bf16.mxu0 0
        %629 = vmatpush2.bf16.xpose.msra.mxu0 0
        %630 = vmatprep.mubr.bf16.mxu0 0
        %631 = vmatmul.mubr.bf16.gmra.mxu0 %v593
        %v632 = vpop.f32.mrf.mxu0
        %v633 = vadd.f32 0.0, %v632
        %v634 = vpop.f32.mrf.mxu0
        %v635 = vpop.f32.mrf.mxu0
        %v636 = vpop.f32.mrf.mxu0
        %637 = vdwg.mxu0
        %v638 = vsel %vm358, %v633, -inf
        %639 = vmax.xlane.f32.xlu0 %v638
        %v640 = vpop.xlane.xlu0 %639
        %v641 = vsub.f32 %v633, %v640
        %v642 = vmul.f32 %v641, 1.442695
        %v643 = vpow.pop %v642
        %v644 = vsel %vm358, %v643, 0.0
        %645 = vadd.xlane.f32.xlu0 %v644
        %v646 = vpop.xlane.xlu0 %645
        %v647 = vrcp.pop %v646
        %v648 = vpack.c.bf16 %v643, %v643
        %649 = vrot.lane.b32.xlu0 %v354, 48
        %v650 = vpop.permute.xlu0 %649
        %v652 = vsel %vm358, %v648, 0
        %v655 = vsel %vm421, %v650, 0
        %657 = vmatprep.subr.bf16.mxu0 0
        %658 = vmatpush1.bf16.msra.mxu0 0
        %659 = vmatprep.subr.bf16.mxu0 0
        %660 = vmatpush1.bf16.msra.mxu0 0
        %661 = vmatprep.subr.bf16.mxu0 0
        %662 = vmatpush1.bf16.msra.mxu0 0
        %663 = vmatprep.subr.bf16.mxu0 0
        %664 = vmatpush1.bf16.msra.mxu0 0
        %665 = vmatprep.subr.bf16.mxu0 0
        %666 = vmatpush1.bf16.msra.mxu0 0
        %667 = vmatprep.subr.bf16.mxu0 0
        %668 = vmatpush1.bf16.msra.mxu0 0
        %669 = vmatprep.subr.bf16.mxu0 0
        %670 = vmatpush1.bf16.msra.mxu0 0
        %671 = vmatprep.subr.bf16.mxu0 0
        %672 = vmatpush1.bf16.msra.mxu0 %v655
        %673 = vmatprep.subr.bf16.mxu0 0
        %674 = vmatpush2.bf16.msra.mxu0 0
        %675 = vmatprep.subr.bf16.mxu0 0
        %676 = vmatpush2.bf16.msra.mxu0 0
        %677 = vmatprep.subr.bf16.mxu0 0
        %678 = vmatpush2.bf16.msra.mxu0 0
        %679 = vmatprep.subr.bf16.mxu0 0
        %680 = vmatpush2.bf16.msra.mxu0 0
        %681 = vmatprep.subr.bf16.mxu0 0
        %682 = vmatpush2.bf16.msra.mxu0 0
        %683 = vmatprep.subr.bf16.mxu0 0
        %684 = vmatpush2.bf16.msra.mxu0 0
        %685 = vmatprep.subr.bf16.mxu0 0
        %686 = vmatpush2.bf16.msra.mxu0 0
        %687 = vmatprep.subr.bf16.mxu0 0
        %688 = vmatpush2.bf16.msra.mxu0 0
        %689 = vmatprep.mubr.bf16.mxu0 0
        %690 = vmatmul.mubr.bf16.gmra.mxu0 %v652
        %v691 = vpop.f32.mrf.mxu0
        %v692 = vadd.f32 0.0, %v691
        %v693 = vpop.f32.mrf.mxu0
        %v694 = vpop.f32.mrf.mxu0
        %v695 = vpop.f32.mrf.mxu0
        %696 = vdwg.mxu0
        %v697 = vmul.f32 %v692, %v647
        %v698 = vpack.c.bf16 %v697, %v697
        %v700 = vunpack.c.l.b16 %v698
        %v701 = vpack.c.b16 %v700, %v700
        %702 = vrot.lane.b32.xlu0 %v701, 16
        %v703 = vpop.permute.xlu0 %702
        %vm705 = vcmask 191616
        %706 = vst.msk [vmem:[#allocation3] sm:$0xf] %vm705, %v703
        %707 = vrot.lane.b32.xlu0 %v354, 104
        %v708 = vpop.permute.xlu0 %707
        %709 = vrot.lane.b32.xlu0 %v354, 72
        %v710 = vpop.permute.xlu0 %709
        %v712 = vsel %vm358, %v708, 0
        %v715 = vsel %vm358, %v710, 0
        %717 = vmatprep.subr.bf16.mxu0 0
        %718 = vmatpush1.bf16.xpose.msra.mxu0 0
        %719 = vmatprep.subr.bf16.mxu0 0
        %720 = vmatpush1.bf16.xpose.msra.mxu0 0
        %721 = vmatprep.subr.bf16.mxu0 0
        %722 = vmatpush1.bf16.xpose.msra.mxu0 0
        %723 = vmatprep.subr.bf16.mxu0 0
        %724 = vmatpush1.bf16.xpose.msra.mxu0 0
        %725 = vmatprep.subr.bf16.mxu0 0
        %726 = vmatpush1.bf16.xpose.msra.mxu0 0
        %727 = vmatprep.subr.bf16.mxu0 0
        %728 = vmatpush1.bf16.xpose.msra.mxu0 0
        %729 = vmatprep.subr.bf16.mxu0 0
        %730 = vmatpush1.bf16.xpose.msra.mxu0 0
        %731 = vmatprep.subr.bf16.mxu0 0
        %732 = vmatpush1.bf16.xpose.msra.mxu0 %v715
        %733 = vmatprep.subr.bf16.mxu0 0
        %734 = vmatpush2.bf16.xpose.msra.mxu0 0
        %735 = vmatprep.subr.bf16.mxu0 0
        %736 = vmatpush2.bf16.xpose.msra.mxu0 0
        %737 = vmatprep.subr.bf16.mxu0 0
        %738 = vmatpush2.bf16.xpose.msra.mxu0 0
        %739 = vmatprep.subr.bf16.mxu0 0
        %740 = vmatpush2.bf16.xpose.msra.mxu0 0
        %741 = vmatprep.subr.bf16.mxu0 0
        %742 = vmatpush2.bf16.xpose.msra.mxu0 0
        %743 = vmatprep.subr.bf16.mxu0 0
        %744 = vmatpush2.bf16.xpose.msra.mxu0 0
        %745 = vmatprep.subr.bf16.mxu0 0
        %746 = vmatpush2.bf16.xpose.msra.mxu0 0
        %747 = vmatprep.subr.bf16.mxu0 0
        %748 = vmatpush2.bf16.xpose.msra.mxu0 0
        %749 = vmatprep.mubr.bf16.mxu0 0
        %750 = vmatmul.mubr.bf16.gmra.mxu0 %v712
        %v751 = vpop.f32.mrf.mxu0
        %v752 = vadd.f32 0.0, %v751
        %v753 = vpop.f32.mrf.mxu0
        %v754 = vpop.f32.mrf.mxu0
        %v755 = vpop.f32.mrf.mxu0
        %756 = vdwg.mxu0
        %v757 = vsel %vm358, %v752, -inf
        %758 = vmax.xlane.f32.xlu0 %v757
        %v759 = vpop.xlane.xlu0 %758
        %v760 = vsub.f32 %v752, %v759
        %v761 = vmul.f32 %v760, 1.442695
        %v762 = vpow.pop %v761
        %v763 = vsel %vm358, %v762, 0.0
        %764 = vadd.xlane.f32.xlu0 %v763
        %v765 = vpop.xlane.xlu0 %764
        %v766 = vrcp.pop %v765
        %v767 = vpack.c.bf16 %v762, %v762
        %768 = vrot.lane.b32.xlu0 %v354, 40
        %v769 = vpop.permute.xlu0 %768
        %v771 = vsel %vm358, %v767, 0
        %v774 = vsel %vm421, %v769, 0
        %776 = vmatprep.subr.bf16.mxu0 0
        %777 = vmatpush1.bf16.msra.mxu0 0
        %778 = vmatprep.subr.bf16.mxu0 0
        %779 = vmatpush1.bf16.msra.mxu0 0
        %780 = vmatprep.subr.bf16.mxu0 0
        %781 = vmatpush1.bf16.msra.mxu0 0
        %782 = vmatprep.subr.bf16.mxu0 0
        %783 = vmatpush1.bf16.msra.mxu0 0
        %784 = vmatprep.subr.bf16.mxu0 0
        %785 = vmatpush1.bf16.msra.mxu0 0
        %786 = vmatprep.subr.bf16.mxu0 0
        %787 = vmatpush1.bf16.msra.mxu0 0
        %788 = vmatprep.subr.bf16.mxu0 0
        %789 = vmatpush1.bf16.msra.mxu0 0
        %790 = vmatprep.subr.bf16.mxu0 0
        %791 = vmatpush1.bf16.msra.mxu0 %v774
        %792 = vmatprep.subr.bf16.mxu0 0
        %793 = vmatpush2.bf16.msra.mxu0 0
        %794 = vmatprep.subr.bf16.mxu0 0
        %795 = vmatpush2.bf16.msra.mxu0 0
        %796 = vmatprep.subr.bf16.mxu0 0
        %797 = vmatpush2.bf16.msra.mxu0 0
        %798 = vmatprep.subr.bf16.mxu0 0
        %799 = vmatpush2.bf16.msra.mxu0 0
        %800 = vmatprep.subr.bf16.mxu0 0
        %801 = vmatpush2.bf16.msra.mxu0 0
        %802 = vmatprep.subr.bf16.mxu0 0
        %803 = vmatpush2.bf16.msra.mxu0 0
        %804 = vmatprep.subr.bf16.mxu0 0
        %805 = vmatpush2.bf16.msra.mxu0 0
        %806 = vmatprep.subr.bf16.mxu0 0
        %807 = vmatpush2.bf16.msra.mxu0 0
        %808 = vmatprep.mubr.bf16.mxu0 0
        %809 = vmatmul.mubr.bf16.gmra.mxu0 %v771
        %v810 = vpop.f32.mrf.mxu0
        %v811 = vadd.f32 0.0, %v810
        %v812 = vpop.f32.mrf.mxu0
        %v813 = vpop.f32.mrf.mxu0
        %v814 = vpop.f32.mrf.mxu0
        %815 = vdwg.mxu0
        %v816 = vmul.f32 %v811, %v766
        %v817 = vpack.c.bf16 %v816, %v816
        %v819 = vunpack.c.l.b16 %v817
        %v820 = vpack.c.b16 %v819, %v819
        %821 = vrot.lane.b32.xlu0 %v820, 24
        %v822 = vpop.permute.xlu0 %821
        %vm824 = vcmask 257216
        %825 = vst.msk [vmem:[#allocation3] sm:$0xf] %vm824, %v822
        %v826 = vld [vmem:[#allocation3] sm:$0xf]
        %s827 = smul.addr %s283, 4
        %s828 = scalar_lea.vmem [#allocation9], %s827
        %v829 = vld [vmem:[%s828] sm:$0xf]
        %v830 = vld [vmem:[%s828 + $0x4] sm:$0xf]
        %v831 = vld [vmem:[%s828 + $0x8] sm:$0xf]
        %v832 = vld [vmem:[%s828 + $0xc] sm:$0xf]
        %v837 = vunpack.c.l.b16 %v829
        %v838 = vunpack.c.l.b16 %v830
        %v839 = vunpack.c.l.b16 %v831
        %v840 = vunpack.c.l.b16 %v832
        %v841 = vpack.c.b16 %v838, %v837
        %v842 = vpack.c.b16 %v840, %v839
        %v846 = vsel %vm310, %v826, 0
        %848 = vmatprep.subr.bf16.mxu0 0
        %849 = vmatpush1.bf16.msra.mxu0 0
        %850 = vmatprep.subr.bf16.mxu0 0
        %851 = vmatpush1.bf16.msra.mxu0 0
        %852 = vmatprep.subr.bf16.mxu0 0
        %853 = vmatpush1.bf16.msra.mxu0 0
        %854 = vmatprep.subr.bf16.mxu0 0
        %855 = vmatpush1.bf16.msra.mxu0 0
        %856 = vmatprep.subr.bf16.mxu0 0
        %857 = vmatpush1.bf16.msra.mxu0 0
        %858 = vmatprep.subr.bf16.mxu0 0
        %859 = vmatpush1.bf16.msra.mxu0 0
        %860 = vmatprep.subr.bf16.mxu0 0
        %861 = vmatpush1.bf16.msra.mxu0 %v842
        %862 = vmatprep.subr.bf16.mxu0 0
        %863 = vmatpush1.bf16.msra.mxu0 %v841
        %864 = vmatprep.subr.bf16.mxu0 0
        %865 = vmatpush2.bf16.msra.mxu0 0
        %866 = vmatprep.subr.bf16.mxu0 0
        %867 = vmatpush2.bf16.msra.mxu0 0
        %868 = vmatprep.subr.bf16.mxu0 0
        %869 = vmatpush2.bf16.msra.mxu0 0
        %870 = vmatprep.subr.bf16.mxu0 0
        %871 = vmatpush2.bf16.msra.mxu0 0
        %872 = vmatprep.subr.bf16.mxu0 0
        %873 = vmatpush2.bf16.msra.mxu0 0
        %874 = vmatprep.subr.bf16.mxu0 0
        %875 = vmatpush2.bf16.msra.mxu0 0
        %876 = vmatprep.subr.bf16.mxu0 0
        %877 = vmatpush2.bf16.msra.mxu0 0
        %878 = vmatprep.subr.bf16.mxu0 0
        %879 = vmatpush2.bf16.msra.mxu0 0
        %880 = vmatprep.mubr.bf16.mxu0 0
        %881 = vmatmul.mubr.bf16.gmra.mxu0 %v846
        %v882 = vpop.f32.mrf.mxu0
        %v883 = vadd.f32 0.0, %v882
        %v884 = vpop.f32.mrf.mxu0
        %v885 = vpop.f32.mrf.mxu0
        %v886 = vpop.f32.mrf.mxu0
        %887 = vdwg.mxu0
        %p888 = scmp.eq.s32.totalorder %s28, 0
        // Predicated region
        $region53: #{tpu_custom_call.1} parent=39 // pred_check
          %p889 = pneg %p888
        $region54: #{tpu_custom_call.1} parent=39 // pred_check_branch
          %891 = sbr.rel (%p889) target = $region56
        $region55: #{tpu_custom_call.1} parent=39 // pred_region
          %892 = vst.msk [vmem:[#allocation2] sm:$0xff] %vm310, %v883
        $region56: #{tpu_custom_call.1} parent=39 // pred_fallthru
          _
        %p893 = scmp.gt.s32.totalorder %s28, 0
        // Predicated region
        $region57: #{tpu_custom_call.1} parent=39 // pred_check
          %p894 = pneg %p893
        $region58: #{tpu_custom_call.1} parent=39 // pred_check_branch
          %896 = sbr.rel (%p894) target = $region60
        $region59: #{tpu_custom_call.1} parent=39 // pred_region
          %v897 = vld [vmem:[#allocation2] sm:$0xff]
          %v898 = vadd.f32 %v897, %v883
          %899 = vst.msk [vmem:[#allocation2] sm:$0xff] %vm310, %v898
        $region60: #{tpu_custom_call.1} parent=39 // pred_fallthru
          _
        // Predicated region
        $region61: #{tpu_custom_call.1} parent=39 // pred_check
          %p900 = pneg %p888
        $region62: #{tpu_custom_call.1} parent=39 // pred_check_branch
          %902 = sbr.rel (%p900) target = $region64
        $region63: #{tpu_custom_call.1} parent=39 // pred_region
          %v903 = vld [vmem:[#allocation2] sm:$0xff]
          %v904 = vld [vmem:[%s4] sm:$0x1]
          %v906 = vlaneseq
          %v907 = vshrl.u32 %v906, 7
          %v908 = vsub.s32 0, %v907
          %v909 = vrot.slane %v904, %v908
          %v911 = vadd.f32 %v903, %v909
          %912 = vst.msk [vmem:[%s280] sm:$0xff] %vm310, %v911
        $region64: #{tpu_custom_call.1} parent=39 // pred_fallthru
          _
        %s913 = sand.u32 %s153, 1
        %s914 = scalar_lea.sflag [#allocation6], %s913
        %s915 = sand.u32 %s153, 1
        %s916 = smul.addr %s915, 8
        %s917 = scalar_lea.vmem [#allocation10], %s916
        // Predicated region
        $region65: #{tpu_custom_call.1} parent=39 // pred_check
          %p918 = pneg %p163
        $region66: #{tpu_custom_call.1} parent=39 // pred_check_branch
          %920 = sbr.rel (%p918) target = $region68
        $region67: #{tpu_custom_call.1} parent=39 // pred_region
          %s922 = ssub.s32 128, 128
          %923 = vsyncadd %s914, %s922
          %s924 = smul.addr %s27, 128
          %s925 = scalar_lea.hbm %s5, %s924
          %s927 = sshll.u32 %s917, 4
          %s928 = int_to_ptr.vmem [resolvable:$true] %s927
          %930 = dma.vmem_to_hbm [thread:$0]  %s928, 128, %s925, %s914
        $region68: #{tpu_custom_call.1} parent=39 // pred_fallthru
          _
      $region40: #{tpu_custom_call.1} parent=5 // pred_fallthru
        _
      %p931 = scmp.le.s32.totalorder 2, %s18
      // Predicated region
      $region69: #{tpu_custom_call.1} parent=5 // pred_check
        %p932 = pneg %p931
      $region70: #{tpu_custom_call.1} parent=5 // pred_check_branch
        %934 = sbr.rel (%p932) target = $region72
      $region71: #{tpu_custom_call.1} parent=5 // pred_region
        %s935 = ssub.s32 %s18, 2
        // Predicated region
        $region73: #{tpu_custom_call.1} parent=71 // pred_check
          %p936 = pneg %p169
        $region74: #{tpu_custom_call.1} parent=71 // pred_check_branch
          %938 = sbr.rel (%p936) target = $region76
        $region75: #{tpu_custom_call.1} parent=71 // pred_region
          %s939 = sand.u32 %s154, 1
          %s940 = scalar_lea.sflag [#allocation6], %s939
          %s941 = sand.u32 %s154, 1
          %s942 = smul.addr %s941, 8
          %s943 = scalar_lea.vmem [#allocation10], %s942
          %944 = dma.done %s940, 128
        $region76: #{tpu_custom_call.1} parent=71 // pred_fallthru
          _
      $region72: #{tpu_custom_call.1} parent=5 // pred_fallthru
        _
    $region6: #{tpu_custom_call.1} parent=1 // loop_footer
      %s22 = sadd.s32 1, %s18
    $region7: #{tpu_custom_call.1} parent=1 // loop_footer_branch
      %17 = sbr.rel target = $region3
    $region8: #{tpu_custom_call.1} parent=1 // loop_exit
      _
    %945 = vsyncpa [#allocation5], 1
    %s946 = scalar_lea.sflag [#allocation5], 1
    %947 = vsyncpa %s946, 1
    %948 = vsyncpa [#allocation8], 1
    %949 = vsyncpa [#allocation6], 1
    %s950 = scalar_lea.sflag [#allocation6], 1
    %951 = vsyncpa %s950, 1

</llo_original>
